<compile_context>
chip_gen: v7x
topology: tpu7x:2x2x1
jax: 0.10.0
libtpu: 0.0.40
codegen_flags: <defaults>
</compile_context>

<pallas_src>
import numpy as np
import jax
import jax.numpy as jnp
from jax.experimental import pallas as pl
from jax.experimental.pallas import tpu as pltpu

L = 8   # orientations in Scattering2D (kymatio default)
J = 1   # scattering scale, as in the PyTorch module


# --------------------------------------------------------------------------
# Deterministic parameter / filter construction (plain numpy glue)
# --------------------------------------------------------------------------
def _gabor_2d(M, N, sigma, theta, xi, slant=0.5, offset=0):
    R = np.array([[np.cos(theta), -np.sin(theta)],
                  [np.sin(theta),  np.cos(theta)]])
    R_inv = np.array([[np.cos(theta),  np.sin(theta)],
                      [-np.sin(theta), np.cos(theta)]])
    D = np.array([[1.0, 0.0], [0.0, slant * slant]])
    curv = R @ D @ R_inv / (2.0 * sigma * sigma)
    gab = np.zeros((M, N), dtype=np.complex128)
    for ex in (-2, -1, 0, 1, 2):
        for ey in (-2, -1, 0, 1, 2):
            xx, yy = np.mgrid[offset + ex * M: offset + (1 + ex) * M,
                              offset + ey * N: offset + (1 + ey) * N]
            arg = (-(curv[0, 0] * xx * xx
                     + (curv[0, 1] + curv[1, 0]) * xx * yy
                     + curv[1, 1] * yy * yy)
                   + 1j * (xx * np.cos(theta) + yy * np.sin(theta)) * xi)
            gab = gab + np.exp(arg)
    return gab / (2.0 * np.pi * sigma * sigma / slant)


def _morlet_2d(M, N, sigma, theta, xi, slant=0.5):
    wv = _gabor_2d(M, N, sigma, theta, xi, slant)
    wv_mod = _gabor_2d(M, N, sigma, theta, 0.0, slant)
    K = wv.sum() / wv_mod.sum()
    return wv - K * wv_mod


def _circulant_2d(kern):
    """Dense matrix of 2-D circular convolution with `kern` (n,n) -> (n^2,n^2)."""
    n = kern.shape[0]
    idx = np.arange(n)
    d = (idx[:, None] - idx[None, :]) % n                   # (p - q) mod n
    mat = kern[d[:, None, :, None], d[None, :, None, :]]    # [p1,p2,q1,q2]
    return mat.reshape(n * n, n * n)


def _bilinear_matrix(big, small):
    """1-D bilinear interpolation matrix, PyTorch align_corners=False."""
    U = np.zeros((big, small), dtype=np.float64)
    scale = small / big
    for i in range(big):
        src = max((i + 0.5) * scale - 0.5, 0.0)
        i0 = min(int(np.floor(src)), small - 1)
        i1 = min(i0 + 1, small - 1)
        w1 = src - i0
        U[i, i0] += 1.0 - w1
        U[i, i1] += w1
    return U


def build_scatter_transform_params(in_channels, out_channels, batch,
                                   input_size, key):
    """All kernel-ready constants, built once (bf16 for every MXU operand)."""
    N = input_size
    P = N * N
    hs = N // 2

    # Morlet psi filters, j=0, 8 orientations (kymatio filter_bank
    # conventions), pre-transposed. Per-orientation layout: [R_t | I_t] so
    # each grid step consumes one contiguous (P, 2P) slab.
    slabs = []
    for t in range(L):
        theta = (int(L - L / 2 - 1) - t) * np.pi / L
        kern = _morlet_2d(N, N, 0.8, theta, 3.0 / 4.0 * np.pi, 4.0 / L)
        slabs.append(np.concatenate([_circulant_2d(kern.real).T,
                                     _circulant_2d(kern.imag).T], axis=1))
    PsiOriented = np.concatenate(slabs, axis=1).astype(np.float32)  # (P, 2*L*P)

    # Low-pass phi (real Gaussian), fused with the 2^J spatial subsampling.
    phi_kern = _gabor_2d(N, N, 0.8 * 2 ** (J - 1), 0.0, 0.0).real
    PhiMat = _circulant_2d(phi_kern)                 # (P, P)
    sub = (np.arange(0, N, 2)[:, None] * N +
           np.arange(0, N, 2)[None, :]).reshape(-1)
    PhiSubT = PhiMat[sub, :].T.astype(np.float32)    # (P, Q)

    # Bilinear upsample (hs,hs) -> (N,N) as one (Q, P) matrix (separable).
    U = _bilinear_matrix(N, hs)
    UpT = np.kron(U, U).T.astype(np.float32)         # (Q, P)

    # 1x1 conv parameters: deterministic random init (synthetic, no checkpoint).
    kw, kb = jax.random.split(key)
    C, OC, B = in_channels, out_channels, batch
    c9 = C * (1 + L)
    Wm = (jax.random.normal(kw, (OC, c9), jnp.float32)
          * np.float32(1.0 / np.sqrt(c9)))
    bias = jax.random.normal(kb, (OC, 1), jnp.float32) * np.float32(0.01)

    # Per-coefficient conv weight, block-diagonal over batch, built ONCE:
    #   Wcoef[k, b*OC + o, d*C + c] = Wm[o, c*9 + k] * (b == d)
    Wm3 = np.asarray(Wm).reshape(OC, C, 1 + L)       # [o, c, k]
    eyeB = np.eye(B, dtype=np.float32)
    Wcoef = np.einsum('ock,bd->kbodc', Wm3, eyeB).reshape(1 + L, B * OC, B * C)
    bias_big = np.tile(np.asarray(bias), (B, 1))     # (B*OC, 1)

    return {
        'psi': jnp.asarray(PsiOriented, dtype=jnp.bfloat16),   # (P, 2LP)
        'phi': jnp.asarray(PhiSubT, dtype=jnp.bfloat16),       # (P, Q)
        'up': jnp.asarray(UpT, dtype=jnp.bfloat16),            # (Q, P)
        'wcoef': jnp.asarray(Wcoef, dtype=jnp.bfloat16),       # (9, B*OC, B*C)
        'bias_big': jnp.asarray(bias_big, dtype=jnp.float32),  # (B*OC, 1)
        # f32 copies for the pure-JAX reference only:
        'wm_f32': Wm, 'bias_f32': bias,
    }


# --------------------------------------------------------------------------
# Fused Pallas kernel: scattering + low-pass + 1x1 conv + bilinear upsample
# Grid = (L,) orientations; psi slab is the only pipelined (DMA'd) operand.
# --------------------------------------------------------------------------
def _fused_scatter_kernel(x_ref, psi_ref, phi_ref, up_ref, w_ref, b_ref,
                          o_ref, acc_ref):
    k = pl.program_id(0)
    P = x_ref.shape[1]

    x = x_ref[...]        # (M, P)  bf16, VMEM-resident across all steps
    phi = phi_ref[...]    # (P, Q)  bf16, resident

    # Order-0 coefficient (low-pass of the input itself) initialises the
    # 1x1-conv accumulator on the first step.
    @pl.when(k == 0)
    def _():
        s0 = jnp.dot(x, phi, preferred_element_type=jnp.float32)       # (M, Q)
        acc_ref[...] = jnp.dot(w_ref[0], s0.astype(jnp.bfloat16),
                               preferred_element_type=jnp.float32)     # (B*OC, Q)

    # One orientation per grid step: real+imag circulant filters arrive as a
    # single (P, 2P) bf16 slab -> one wide MXU matmul, then modulus.
    u = jnp.dot(x, psi_ref[...], preferred_element_type=jnp.float32)   # (M, 2P)
    ur = u[:, :P]
    ui = u[:, P:]
    umod = jnp.sqrt(ur * ur + ui * ui).astype(jnp.bfloat16)            # (M, P)

    # Low-pass + subsample of the modulus, then fold straight into the conv
    # accumulator with this coefficient's (B*OC, M) weight block.
    s1 = jnp.dot(umod, phi, preferred_element_type=jnp.float32)        # (M, Q)
    acc_ref[...] += jnp.dot(w_ref[k + 1], s1.astype(jnp.bfloat16),
                            preferred_element_type=jnp.float32)        # (B*OC, Q)

    # Epilogue on the last orientation: bilinear upsample + bias.
    @pl.when(k == pl.num_programs(0) - 1)
    def _():
        out = jnp.dot(acc_ref[...].astype(jnp.bfloat16), up_ref[...],
                      preferred_element_type=jnp.float32)              # (B*OC, P)
        o_ref[...] = out + b_ref[...]


def scatter_transform_forward(x, params):
    psi, phi, up = params['psi'], params['phi'], params['up']
    wcoef, bias_big = params['wcoef'], params['bias_big']

    B, C, N, _ = x.shape
    P = N * N
    Q = phi.shape[1]
    M = B * C
    BOC = wcoef.shape[1]
    OC = BOC // B
    n_coef = 1 + L

    x_flat = x.reshape(M, P).astype(jnp.bfloat16)

    flops = (L * (2 * M * P * (2 * P)          # per-orientation psi matmul
                  + 2 * M * P * Q              # per-orientation low-pass
                  + 2 * BOC * M * Q)           # per-orientation conv fold
             + 2 * M * P * Q                   # order-0 low-pass
             + 2 * BOC * M * Q                 # order-0 conv fold
             + 2 * BOC * Q * P)                # bilinear upsample
    bytes_accessed = (x_flat.size * 2 + psi.size * 2 + phi.size * 2
                      + up.size * 2 + wcoef.size * 2 + bias_big.size * 4
                      + BOC * P * 4)

    out_flat = pl.pallas_call(
        _fused_scatter_kernel,
        out_shape=jax.ShapeDtypeStruct((BOC, P), jnp.float32),
        grid_spec=pltpu.PrefetchScalarGridSpec(
            num_scalar_prefetch=0,
            grid=(L,),
            in_specs=[
                pl.BlockSpec((M, P), lambda k: (0, 0)),            # x (resident)
                pl.BlockSpec((P, 2 * P), lambda k: (0, k)),        # psi slab (pipelined)
                pl.BlockSpec((P, Q), lambda k: (0, 0)),            # phi (resident)
                pl.BlockSpec((Q, P), lambda k: (0, 0)),            # upsample (resident)
                pl.BlockSpec((n_coef, BOC, M), lambda k: (0, 0, 0)),  # conv weights
                pl.BlockSpec((BOC, 1), lambda k: (0, 0)),          # bias
            ],
            out_specs=pl.BlockSpec((BOC, P), lambda k: (0, 0)),
            scratch_shapes=[pltpu.VMEM((BOC, Q), jnp.float32)],
        ),
        compiler_params=pltpu.CompilerParams(
            dimension_semantics=("arbitrary",)),
        cost_estimate=pl.CostEstimate(
            flops=int(flops),
            transcendentals=int(L * M * P),
            bytes_accessed=int(bytes_accessed)),
    )(x_flat, psi, phi, up, wcoef, bias_big)

    return out_flat.reshape(B, OC, N, N)


# --------------------------------------------------------------------------
# Pure-JAX f32 reference (same bf16-quantised operators) for correctness
# --------------------------------------------------------------------------
def reference_forward(x, params):
    psi = params['psi'].astype(jnp.float32)
    phi = params['phi'].astype(jnp.float32)
    up = params['up'].astype(jnp.float32)
    Wm = params['wm_f32']
    bias = params['bias_f32']

    B, C, N, _ = x.shape
    P = N * N
    OC = Wm.shape[0]
    hp = jax.lax.Precision.HIGHEST

    xf = x.reshape(B * C, P)
    coeffs = [jnp.dot(xf, phi, precision=hp)]
    for t in range(L):
        slab = psi[:, t * 2 * P:(t + 1) * 2 * P]
        ur = jnp.dot(xf, slab[:, :P], precision=hp)
        ui = jnp.dot(xf, slab[:, P:], precision=hp)
        coeffs.append(jnp.dot(jnp.sqrt(ur * ur + ui * ui), phi, precision=hp))
    s = jnp.stack(coeffs, axis=1).reshape(B, C * (1 + L), -1)   # channel = c*9 + k
    upped = jnp.einsum('bcq,qp->bcp', s, up, precision=hp)
    o = jnp.einsum('oc,bcp->bop', Wm, upped, precision=hp) + bias[None, :, :]
    return o.reshape(B, OC, N, N)


if __name__ == "__main__":
    B, C, OC = 2, 4, 8
    input_size = 16                          # H = W = 16, scattering output 8x8

    key = jax.random.PRNGKey(0)
    kx, kp = jax.random.split(key)
    x = jax.random.normal(kx, (B, C, input_size, input_size), jnp.float32)

    params = build_scatter_transform_params(C, OC, B, input_size, kp)

    out = jax.block_until_ready(scatter_transform_forward(x, params))
    ref = jax.block_until_ready(reference_forward(x, params))

    assert out.shape == (B, OC, input_size, input_size)
    assert bool(jnp.all(jnp.isfinite(out)))
    rel = float(jnp.max(jnp.abs(out - ref)) / (jnp.max(jnp.abs(ref)) + 1e-6))
    assert rel < 2e-2, f"mismatch vs reference: rel={rel}"
    print("KERNEL_OK")
</pallas_src>

<mosaic_0001>
module attributes {stable_mosaic.version = 11 : i64} {
  func.func @_fused_scatter_kernel(%arg0: i32, %arg1: memref<8x256xbf16, #tpu.memory_space<vmem>>, %arg2: memref<256x512xbf16, #tpu.memory_space<vmem>>, %arg3: memref<256x64xbf16, #tpu.memory_space<vmem>>, %arg4: memref<64x256xbf16, #tpu.memory_space<vmem>>, %arg5: memref<9x16x8xbf16, #tpu.memory_space<vmem>>, %arg6: memref<16x1xf32, #tpu.memory_space<vmem>>, %arg7: memref<16x256xf32, #tpu.memory_space<vmem>>, %arg8: memref<16x64xf32, #tpu.memory_space<vmem>>) attributes {dimension_semantics = [#tpu.dimension_semantics<arbitrary>], iteration_bounds = array<i64: 8>, scalar_prefetch = 0 : i64, scratch_operands = 1 : i64, tpu.core_type = #tpu.core_type<tc>, window_params = [{pipeline_mode = #tpu.pipeline_mode<synchronous>, transform_indices = @transform_0, window_bounds = array<i64: 8, 256>}, {transform_indices = @transform_1, window_bounds = array<i64: 256, 512>}, {pipeline_mode = #tpu.pipeline_mode<synchronous>, transform_indices = @transform_2, window_bounds = array<i64: 256, 64>}, {pipeline_mode = #tpu.pipeline_mode<synchronous>, transform_indices = @transform_3, window_bounds = array<i64: 64, 256>}, {pipeline_mode = #tpu.pipeline_mode<synchronous>, transform_indices = @transform_4, window_bounds = array<i64: 9, 16, 8>}, {pipeline_mode = #tpu.pipeline_mode<synchronous>, transform_indices = @transform_5, window_bounds = array<i64: 16, 1>}, {pipeline_mode = #tpu.pipeline_mode<synchronous>, transform_indices = @transform_6, window_bounds = array<i64: 16, 256>}]} {
    %c0 = arith.constant 0 : index
    %c0_0 = arith.constant 0 : index
    %0 = vector.load %arg1[%c0, %c0_0] : memref<8x256xbf16, #tpu.memory_space<vmem>>, vector<8x256xbf16>
    %c0_1 = arith.constant 0 : index
    %c0_2 = arith.constant 0 : index
    %1 = vector.load %arg3[%c0_1, %c0_2] : memref<256x64xbf16, #tpu.memory_space<vmem>>, vector<256x64xbf16>
    %c0_i32 = arith.constant 0 : i32
    %2 = arith.cmpi eq, %arg0, %c0_i32 : i32
    %3 = arith.extui %2 : i1 to i32
    %c0_i32_3 = arith.constant 0 : i32
    %4 = arith.cmpi ne, %3, %c0_i32_3 : i32
    scf.if %4 {
      %cst_15 = arith.constant dense<0.000000e+00> : vector<8x64xf32>
      %27 = tpu.matmul %0, %1, %cst_15 {dimension_numbers = #tpu.dot_dimension_numbers<[1], [0], [0], [1], [0, 0, 1, 1], [], []>} : vector<8x256xbf16>, vector<256x64xbf16>, vector<8x64xf32> -> vector<8x64xf32>
      %c0_16 = arith.constant 0 : index
      %c0_17 = arith.constant 0 : index
      %c0_18 = arith.constant 0 : index
      %28 = vector.load %arg5[%c0_16, %c0_17, %c0_18] : memref<9x16x8xbf16, #tpu.memory_space<vmem>>, vector<1x16x8xbf16>
      %29 = vector.shape_cast %28 : vector<1x16x8xbf16> to vector<16x8xbf16>
      %30 = arith.truncf %27 : vector<8x64xf32> to vector<8x64xbf16>
      %cst_19 = arith.constant dense<0.000000e+00> : vector<16x64xf32>
      %31 = tpu.matmul %29, %30, %cst_19 {dimension_numbers = #tpu.dot_dimension_numbers<[1], [0], [0], [1], [0, 0, 1, 1], [], []>} : vector<16x8xbf16>, vector<8x64xbf16>, vector<16x64xf32> -> vector<16x64xf32>
      %c0_20 = arith.constant 0 : index
      %c0_21 = arith.constant 0 : index
      %32 = vector.load %arg8[%c0_20, %c0_21] : memref<16x64xf32, #tpu.memory_space<vmem>>, vector<16x64xf32>
      tpu.vector_store %arg8[%c0_20, %c0_21], %31 {strides = array<i32>} : memref<16x64xf32, #tpu.memory_space<vmem>>, vector<16x64xf32>,
    } else {
    }
    %c0_4 = arith.constant 0 : index
    %c0_5 = arith.constant 0 : index
    %5 = vector.load %arg2[%c0_4, %c0_5] : memref<256x512xbf16, #tpu.memory_space<vmem>>, vector<256x512xbf16>
    %cst = arith.constant dense<0.000000e+00> : vector<8x512xf32>
    %6 = tpu.matmul %0, %5, %cst {dimension_numbers = #tpu.dot_dimension_numbers<[1], [0], [0], [1], [0, 0, 1, 1], [], []>} : vector<8x256xbf16>, vector<256x512xbf16>, vector<8x512xf32> -> vector<8x512xf32>
    %7 = vector.extract_strided_slice %6 {offsets = [0, 0], sizes = [8, 256], strides = [1, 1]} : vector<8x512xf32> to vector<8x256xf32>
    %8 = vector.extract_strided_slice %6 {offsets = [0, 256], sizes = [8, 256], strides = [1, 1]} : vector<8x512xf32> to vector<8x256xf32>
    %9 = arith.mulf %7, %7 : vector<8x256xf32>
    %10 = arith.mulf %8, %8 : vector<8x256xf32>
    %11 = arith.addf %9, %10 : vector<8x256xf32>
    %12 = math.sqrt %11 : vector<8x256xf32>
    %13 = arith.truncf %12 : vector<8x256xf32> to vector<8x256xbf16>
    %cst_6 = arith.constant dense<0.000000e+00> : vector<8x64xf32>
    %14 = tpu.matmul %13, %1, %cst_6 {dimension_numbers = #tpu.dot_dimension_numbers<[1], [0], [0], [1], [0, 0, 1, 1], [], []>} : vector<8x256xbf16>, vector<256x64xbf16>, vector<8x64xf32> -> vector<8x64xf32>
    %c0_7 = arith.constant 0 : index
    %c0_8 = arith.constant 0 : index
    %15 = vector.load %arg8[%c0_7, %c0_8] : memref<16x64xf32, #tpu.memory_space<vmem>>, vector<16x64xf32>
    %c1_i32 = arith.constant 1 : i32
    %16 = arith.addi %arg0, %c1_i32 : i32
    %17 = arith.index_cast %16 : i32 to index
    %c0_9 = arith.constant 0 : index
    %c0_10 = arith.constant 0 : index
    %18 = vector.load %arg5[%17, %c0_9, %c0_10] : memref<9x16x8xbf16, #tpu.memory_space<vmem>>, vector<1x16x8xbf16>
    %19 = vector.shape_cast %18 : vector<1x16x8xbf16> to vector<16x8xbf16>
    %20 = arith.truncf %14 : vector<8x64xf32> to vector<8x64xbf16>
    %cst_11 = arith.constant dense<0.000000e+00> : vector<16x64xf32>
    %21 = tpu.matmul %19, %20, %cst_11 {dimension_numbers = #tpu.dot_dimension_numbers<[1], [0], [0], [1], [0, 0, 1, 1], [], []>} : vector<16x8xbf16>, vector<8x64xbf16>, vector<16x64xf32> -> vector<16x64xf32>
    %22 = arith.addf %15, %21 : vector<16x64xf32>
    %c0_12 = arith.constant 0 : index
    %c0_13 = arith.constant 0 : index
    %23 = vector.load %arg8[%c0_12, %c0_13] : memref<16x64xf32, #tpu.memory_space<vmem>>, vector<16x64xf32>
    tpu.vector_store %arg8[%c0_12, %c0_13], %22 {strides = array<i32>} : memref<16x64xf32, #tpu.memory_space<vmem>>, vector<16x64xf32>,
    %c7_i32 = arith.constant 7 : i32
    %24 = arith.cmpi eq, %arg0, %c7_i32 : i32
    %25 = arith.extui %24 : i1 to i32
    %c0_i32_14 = arith.constant 0 : i32
    %26 = arith.cmpi ne, %25, %c0_i32_14 : i32
    scf.if %26 {
      %c0_15 = arith.constant 0 : index
      %c0_16 = arith.constant 0 : index
      %27 = vector.load %arg8[%c0_15, %c0_16] : memref<16x64xf32, #tpu.memory_space<vmem>>, vector<16x64xf32>
      %28 = arith.truncf %27 : vector<16x64xf32> to vector<16x64xbf16>
      %c0_17 = arith.constant 0 : index
      %c0_18 = arith.constant 0 : index
      %29 = vector.load %arg4[%c0_17, %c0_18] : memref<64x256xbf16, #tpu.memory_space<vmem>>, vector<64x256xbf16>
      %cst_19 = arith.constant dense<0.000000e+00> : vector<16x256xf32>
      %30 = tpu.matmul %28, %29, %cst_19 {dimension_numbers = #tpu.dot_dimension_numbers<[1], [0], [0], [1], [0, 0, 1, 1], [], []>} : vector<16x64xbf16>, vector<64x256xbf16>, vector<16x256xf32> -> vector<16x256xf32>
      %c0_20 = arith.constant 0 : index
      %c0_21 = arith.constant 0 : index
      %31 = vector.load %arg6[%c0_20, %c0_21] : memref<16x1xf32, #tpu.memory_space<vmem>>, vector<16x1xf32>
      %32 = vector.broadcast %31 : vector<16x1xf32> to vector<16x256xf32>
      %33 = arith.addf %30, %32 : vector<16x256xf32>
      %c0_22 = arith.constant 0 : index
      %c0_23 = arith.constant 0 : index
      %34 = vector.load %arg7[%c0_22, %c0_23] : memref<16x256xf32, #tpu.memory_space<vmem>>, vector<16x256xf32>
      tpu.vector_store %arg7[%c0_22, %c0_23], %33 {strides = array<i32>} : memref<16x256xf32, #tpu.memory_space<vmem>>, vector<16x256xf32>,
    } else {
    }
    return
  }
  func.func @transform_0(%arg0: i32) -> (i32, i32) {
    %c0_i32 = arith.constant 0 : i32
    %c0_i32_0 = arith.constant 0 : i32
    %c0_i32_1 = arith.constant 0 : i32
    return %c0_i32, %c0_i32_0 : i32, i32
  }
  func.func @transform_1(%arg0: i32) -> (i32, i32) {
    %c0_i32 = arith.constant 0 : i32
    %c0_i32_0 = arith.constant 0 : i32
    return %c0_i32, %arg0 : i32, i32
  }
  func.func @transform_2(%arg0: i32) -> (i32, i32) {
    %c0_i32 = arith.constant 0 : i32
    %c0_i32_0 = arith.constant 0 : i32
    %c0_i32_1 = arith.constant 0 : i32
    return %c0_i32, %c0_i32_0 : i32, i32
  }
  func.func @transform_3(%arg0: i32) -> (i32, i32) {
    %c0_i32 = arith.constant 0 : i32
    %c0_i32_0 = arith.constant 0 : i32
    %c0_i32_1 = arith.constant 0 : i32
    return %c0_i32, %c0_i32_0 : i32, i32
  }
  func.func @transform_4(%arg0: i32) -> (i32, i32, i32) {
    %c0_i32 = arith.constant 0 : i32
    %c0_i32_0 = arith.constant 0 : i32
    %c0_i32_1 = arith.constant 0 : i32
    %c0_i32_2 = arith.constant 0 : i32
    return %c0_i32, %c0_i32_0, %c0_i32_1 : i32, i32, i32
  }
  func.func @transform_5(%arg0: i32) -> (i32, i32) {
    %c0_i32 = arith.constant 0 : i32
    %c0_i32_0 = arith.constant 0 : i32
    %c0_i32_1 = arith.constant 0 : i32
    return %c0_i32, %c0_i32_0 : i32, i32
  }
  func.func @transform_6(%arg0: i32) -> (i32, i32) {
    %c0_i32 = arith.constant 0 : i32
    %c0_i32_0 = arith.constant 0 : i32
    %c0_i32_1 = arith.constant 0 : i32
    return %c0_i32, %c0_i32_0 : i32, i32
  }
}

</mosaic_0001>

<llo_original>
// kernel: tpu_custom_call.1
$region0: #{tpu_custom_call.1}
  #allocation0 [shape = 'u32[]', space=smem, size = 0x4, offset = 0x4, fixed_abs, tag = 'smem constant byte address 0x4 - core index']
  #allocation1 [shape = 'u32[144,128]{1,0:T(1,128)}', space=vmem, size = 0x12000, scoped, tag = 'internal scratch']
  #allocation2 [shape = 'f32[16,64]{1,0:T(8,128)}', space=vmem, size = 0x2000, scoped, tag = 'scratch operand']
  %s0 = inlined_call_operand.hbm [shape: bf16[8,256], index: 0, kind: input, shape index: {}]
  %s1 = inlined_call_operand.hbm [shape: bf16[256,4096], index: 1, kind: input, shape index: {}]
  %s2 = inlined_call_operand.vmem [shape: bf16[256,64], index: 2, kind: input, shape index: {}]
  %s3 = inlined_call_operand.hbm [shape: bf16[64,256], index: 3, kind: input, shape index: {}]
  %s4 = inlined_call_operand.vmem [shape: bf16[9,16,8], index: 4, kind: input, shape index: {}]
  %s5 = inlined_call_operand.vmem [shape: f32[16,1], index: 5, kind: input, shape index: {}]
  %s6 = inlined_call_operand.hbm [shape: f32[16,256], index: 6, kind: output, shape index: {}]
  %s7 = sld [smem:[#allocation0]]
  $region77: #{tpu_custom_call.1} parent=0
    _
  %s9 = ssub.s32 1, %s7
  %s10 = scalar_select 0, %s9, %s7
  $region1: #{tpu_custom_call.1} parent=0
    #allocation3 [shape = 'u8[4096]{0}', space=vmem, size = 0x1000, scoped, tag = 'input window, operand 0, single buffered']
    #allocation4 [shape = 's32[2]{0}', space=sflag, size = 0x8, scoped, tag = 'scoped memory for tpu_custom_call.1']
    #allocation5 [shape = 's32[2]{0}', space=sflag, size = 0x8, scoped, tag = 'scoped memory for tpu_custom_call.1']
    #allocation6 [shape = 'u8[524288]{0}', space=vmem, size = 0x80000, scoped, tag = 'input window, operand 1']
    #allocation7 [shape = 's32[2]{0}', space=sflag, size = 0x8, scoped, tag = 'scoped memory for tpu_custom_call.1']
    #allocation8 [shape = 'u8[32768]{0}', space=vmem, size = 0x8000, scoped, tag = 'input window, operand 3, single buffered']
    #allocation9 [shape = 'u8[16384]{0}', space=vmem, size = 0x4000, scoped, tag = 'output window, operand 0, single buffered']
    %11 = vsyncpa [#allocation4], 0
    %12 = vsyncpa [#allocation7], 0
    %s13 = scalar_lea.sflag [#allocation7], 1
    %14 = vsyncpa %s13, 0
    %15 = vsyncpa [#allocation5], 0
    loop: start=0, step=1, limit=10
    $region2: #{tpu_custom_call.1} parent=1 // loop_pre_header
      _
    $region3: #{tpu_custom_call.1} parent=1 // loop_header
      %s17 = sphi 0, %s21
      %p18 = scmp.ge.s32.totalorder %s17, 10
      %s25 = sphi 0, %s25
      %s27 = sphi 0, %s25
      %s28 = sphi 0, %s27
      %s42 = sphi 0, %s28
      %s48 = sphi 0, %s50
      %s51 = sphi 0, %s48
      %s52 = sphi 0, %s51
      %s68 = sphi 0, %s52
      %s72 = sphi 0, %s72
      %s74 = sphi 0, %s72
      %s75 = sphi 0, %s74
      %s89 = sphi 0, %s75
      %s93 = sphi 0, %s93
      %s95 = sphi 0, %s93
      %s96 = sphi 0, %s95
      %s110 = sphi 0, %s96
      %s114 = sphi 0, %s114
      %s116 = sphi 0, %s114
      %s117 = sphi 0, %s116
      %s131 = sphi 0, %s117
      %s135 = sphi 0, %s135
      %s137 = sphi 0, %s135
      %s138 = sphi 0, %s137
      %s152 = sphi 0, %s138
      %s156 = sphi 0, %s156
      %s158 = sphi 0, %s156
      %s159 = sphi 0, %s158
      %s173 = sphi 0, %s159
    $region4: #{tpu_custom_call.1} parent=1 // loop_header_branch
      %20 = sbr.rel (%p18) target = $region8
    $region5: #{tpu_custom_call.1} parent=1 // loop_body
      %s22 = ssub.s32 %s17, 1
      %s23 = ssub.s32 %s17, 2
      %s24 = sadd.s32 %s17, 1
      %s26 = sadd.s32 %s25, 1
      %p29 = scmp.eq.s32.totalorder %s17, 7
      %p30 = scmp.ne.s32.totalorder %s25, %s27
      %p31 = scmp.eq.s32.totalorder %s17, 0
      %p32 = por %p30, %p31
      %p33 = scmp.ne.s32.totalorder %s25, %s27
      %p34 = scmp.eq.s32.totalorder %s22, 7
      %p35 = por %p33, %p34
      %p36 = scmp.ne.s32.totalorder %s27, %s28
      %p37 = scmp.eq.s32.totalorder %s22, 0
      %p38 = por %p36, %p37
      %p39 = scmp.ne.s32.totalorder %s27, %s28
      %p40 = scmp.eq.s32.totalorder %s23, 7
      %p41 = por %p39, %p40
      %p43 = scmp.ne.s32.totalorder %s28, %s42
      %p44 = scmp.eq.s32.totalorder %s23, 0
      %p45 = por %p43, %p44
      %s46 = ssub.s32 %s17, %s24
      %p47 = scmp.eq.s32.totalorder %s46, 0
      %s49 = sadd.s32 %s48, 1
      %s50 = scalar_select %p47, %s48, %s49
      %p53 = pneg %p47
      %p54 = scmp.eq.s32.totalorder %s17, 7
      %p55 = por %p53, %p54
      %p56 = scmp.ne.s32.totalorder %s48, %s51
      %p57 = scmp.eq.s32.totalorder %s17, 0
      %p58 = por %p56, %p57
      %p59 = scmp.ne.s32.totalorder %s48, %s51
      %p60 = scmp.eq.s32.totalorder %s22, 7
      %p61 = por %p59, %p60
      %p62 = scmp.ne.s32.totalorder %s51, %s52
      %p63 = scmp.eq.s32.totalorder %s22, 0
      %p64 = por %p62, %p63
      %p65 = scmp.ne.s32.totalorder %s51, %s52
      %p66 = scmp.eq.s32.totalorder %s23, 7
      %p67 = por %p65, %p66
      %p69 = scmp.ne.s32.totalorder %s52, %s68
      %p70 = scmp.eq.s32.totalorder %s23, 0
      %p71 = por %p69, %p70
      %s73 = sadd.s32 %s72, 1
      %p76 = scmp.eq.s32.totalorder %s17, 7
      %p77 = scmp.ne.s32.totalorder %s72, %s74
      %p78 = scmp.eq.s32.totalorder %s17, 0
      %p79 = por %p77, %p78
      %p80 = scmp.ne.s32.totalorder %s72, %s74
      %p81 = scmp.eq.s32.totalorder %s22, 7
      %p82 = por %p80, %p81
      %p83 = scmp.ne.s32.totalorder %s74, %s75
      %p84 = scmp.eq.s32.totalorder %s22, 0
      %p85 = por %p83, %p84
      %p86 = scmp.ne.s32.totalorder %s74, %s75
      %p87 = scmp.eq.s32.totalorder %s23, 7
      %p88 = por %p86, %p87
      %p90 = scmp.ne.s32.totalorder %s75, %s89
      %p91 = scmp.eq.s32.totalorder %s23, 0
      %p92 = por %p90, %p91
      %s94 = sadd.s32 %s93, 1
      %p97 = scmp.eq.s32.totalorder %s17, 7
      %p98 = scmp.ne.s32.totalorder %s93, %s95
      %p99 = scmp.eq.s32.totalorder %s17, 0
      %p100 = por %p98, %p99
      %p101 = scmp.ne.s32.totalorder %s93, %s95
      %p102 = scmp.eq.s32.totalorder %s22, 7
      %p103 = por %p101, %p102
      %p104 = scmp.ne.s32.totalorder %s95, %s96
      %p105 = scmp.eq.s32.totalorder %s22, 0
      %p106 = por %p104, %p105
      %p107 = scmp.ne.s32.totalorder %s95, %s96
      %p108 = scmp.eq.s32.totalorder %s23, 7
      %p109 = por %p107, %p108
      %p111 = scmp.ne.s32.totalorder %s96, %s110
      %p112 = scmp.eq.s32.totalorder %s23, 0
      %p113 = por %p111, %p112
      %s115 = sadd.s32 %s114, 1
      %p118 = scmp.eq.s32.totalorder %s17, 7
      %p119 = scmp.ne.s32.totalorder %s114, %s116
      %p120 = scmp.eq.s32.totalorder %s17, 0
      %p121 = por %p119, %p120
      %p122 = scmp.ne.s32.totalorder %s114, %s116
      %p123 = scmp.eq.s32.totalorder %s22, 7
      %p124 = por %p122, %p123
      %p125 = scmp.ne.s32.totalorder %s116, %s117
      %p126 = scmp.eq.s32.totalorder %s22, 0
      %p127 = por %p125, %p126
      %p128 = scmp.ne.s32.totalorder %s116, %s117
      %p129 = scmp.eq.s32.totalorder %s23, 7
      %p130 = por %p128, %p129
      %p132 = scmp.ne.s32.totalorder %s117, %s131
      %p133 = scmp.eq.s32.totalorder %s23, 0
      %p134 = por %p132, %p133
      %s136 = sadd.s32 %s135, 1
      %p139 = scmp.eq.s32.totalorder %s17, 7
      %p140 = scmp.ne.s32.totalorder %s135, %s137
      %p141 = scmp.eq.s32.totalorder %s17, 0
      %p142 = por %p140, %p141
      %p143 = scmp.ne.s32.totalorder %s135, %s137
      %p144 = scmp.eq.s32.totalorder %s22, 7
      %p145 = por %p143, %p144
      %p146 = scmp.ne.s32.totalorder %s137, %s138
      %p147 = scmp.eq.s32.totalorder %s22, 0
      %p148 = por %p146, %p147
      %p149 = scmp.ne.s32.totalorder %s137, %s138
      %p150 = scmp.eq.s32.totalorder %s23, 7
      %p151 = por %p149, %p150
      %p153 = scmp.ne.s32.totalorder %s138, %s152
      %p154 = scmp.eq.s32.totalorder %s23, 0
      %p155 = por %p153, %p154
      %s157 = sadd.s32 %s156, 1
      %p160 = scmp.eq.s32.totalorder %s17, 7
      %p161 = scmp.ne.s32.totalorder %s156, %s158
      %p162 = scmp.eq.s32.totalorder %s17, 0
      %p163 = por %p161, %p162
      %p164 = scmp.ne.s32.totalorder %s156, %s158
      %p165 = scmp.eq.s32.totalorder %s22, 7
      %p166 = por %p164, %p165
      %p167 = scmp.ne.s32.totalorder %s158, %s159
      %p168 = scmp.eq.s32.totalorder %s22, 0
      %p169 = por %p167, %p168
      %p170 = scmp.ne.s32.totalorder %s158, %s159
      %p171 = scmp.eq.s32.totalorder %s23, 7
      %p172 = por %p170, %p171
      %p174 = scmp.ne.s32.totalorder %s159, %s173
      %p175 = scmp.eq.s32.totalorder %s23, 0
      %p176 = por %p174, %p175
      %p177 = scmp.le.s32.totalorder 1, %s17
      %p178 = scmp.lt.s32.totalorder %s17, 9
      %p179 = pnand %p177, %p178
      %p180 = pneg %p179
      // Predicated region
      $region9: #{tpu_custom_call.1} parent=5 // pred_check
        _
      $region10: #{tpu_custom_call.1} parent=5 // pred_check_branch
        %182 = sbr.rel (%p179) target = $region12
      $region11: #{tpu_custom_call.1} parent=5 // pred_region
        %s183 = ssub.s32 %s17, 1
        // Predicated region
        $region13: #{tpu_custom_call.1} parent=11 // pred_check
          %p184 = pneg %p38
        $region14: #{tpu_custom_call.1} parent=11 // pred_check_branch
          %186 = sbr.rel (%p184) target = $region16
        $region15: #{tpu_custom_call.1} parent=11 // pred_region
          %s188 = ssub.s32 128, 128
          %189 = vsyncadd [#allocation4], %s188
          %s191 = sshll.u32 [#allocation3], 4
          %s192 = int_to_ptr.vmem [resolvable:$true] %s191
          %194 = dma.hbm_to_vmem [thread:$0]  %s0, 128, %s192, [#allocation4]
        $region16: #{tpu_custom_call.1} parent=11 // pred_fallthru
          _
        // Predicated region
        $region17: #{tpu_custom_call.1} parent=11 // pred_check
          %p195 = pneg %p85
        $region18: #{tpu_custom_call.1} parent=11 // pred_check_branch
          %197 = sbr.rel (%p195) target = $region20
        $region19: #{tpu_custom_call.1} parent=11 // pred_region
          _
        $region20: #{tpu_custom_call.1} parent=11 // pred_fallthru
          _
        // Predicated region
        $region21: #{tpu_custom_call.1} parent=11 // pred_check
          %p198 = pneg %p106
        $region22: #{tpu_custom_call.1} parent=11 // pred_check_branch
          %200 = sbr.rel (%p198) target = $region24
        $region23: #{tpu_custom_call.1} parent=11 // pred_region
          %s202 = ssub.s32 1024, 1024
          %203 = vsyncadd [#allocation7], %s202
          %s204 = sshll.u32 [#allocation8], 4
          %s205 = int_to_ptr.vmem [resolvable:$true] %s204
          %210 = dma.hbm_to_vmem [thread:$0]  %s3, 1024, %s205, [#allocation7], 128, 128, 8
        $region24: #{tpu_custom_call.1} parent=11 // pred_fallthru
          _
        // Predicated region
        $region25: #{tpu_custom_call.1} parent=11 // pred_check
          %p211 = pneg %p127
        $region26: #{tpu_custom_call.1} parent=11 // pred_check_branch
          %213 = sbr.rel (%p211) target = $region28
        $region27: #{tpu_custom_call.1} parent=11 // pred_region
          _
        $region28: #{tpu_custom_call.1} parent=11 // pred_fallthru
          _
        // Predicated region
        $region29: #{tpu_custom_call.1} parent=11 // pred_check
          %p214 = pneg %p148
        $region30: #{tpu_custom_call.1} parent=11 // pred_check_branch
          %216 = sbr.rel (%p214) target = $region32
        $region31: #{tpu_custom_call.1} parent=11 // pred_region
          _
        $region32: #{tpu_custom_call.1} parent=11 // pred_fallthru
          _
      $region12: #{tpu_custom_call.1} parent=5 // pred_fallthru
        _
      %p217 = scmp.lt.s32.totalorder %s17, 8
      // Predicated region
      $region33: #{tpu_custom_call.1} parent=5 // pred_check
        %p218 = pneg %p217
      $region34: #{tpu_custom_call.1} parent=5 // pred_check_branch
        %220 = sbr.rel (%p218) target = $region36
      $region35: #{tpu_custom_call.1} parent=5 // pred_region
        // Predicated region
        $region37: #{tpu_custom_call.1} parent=35 // pred_check
          %p221 = pneg %p58
        $region38: #{tpu_custom_call.1} parent=35 // pred_check_branch
          %223 = sbr.rel (%p221) target = $region40
        $region39: #{tpu_custom_call.1} parent=35 // pred_region
          %s224 = sand.u32 %s17, 1
          %s225 = scalar_lea.sflag [#allocation7], %s224
          %s226 = sand.u32 %s48, 1
          %s227 = smul.addr %s226, 512
          %s228 = scalar_lea.vmem [#allocation6], %s227
          %s229 = smul.u32 4, %s17
          %s231 = ssub.s32 8192, 8192
          %232 = vsyncadd %s225, %s231
          %s233 = smul.addr %s229, 64
          %s234 = scalar_lea.hbm %s1, %s233
          %s235 = sshll.u32 %s228, 4
          %s236 = int_to_ptr.vmem [resolvable:$true] %s235
          %241 = dma.hbm_to_vmem [thread:$0]  %s234, 8192, %s236, %s225, 2048, 256, 16
        $region40: #{tpu_custom_call.1} parent=35 // pred_fallthru
          _
      $region36: #{tpu_custom_call.1} parent=5 // pred_fallthru
        _
      %p242 = scmp.le.s32.totalorder 1, %s17
      %p243 = scmp.lt.s32.totalorder %s17, 9
      %p244 = pnand %p242, %p243
      %p245 = pneg %p244
      // Predicated region
      $region41: #{tpu_custom_call.1} parent=5 // pred_check
        _
      $region42: #{tpu_custom_call.1} parent=5 // pred_check_branch
        %247 = sbr.rel (%p244) target = $region44
      $region43: #{tpu_custom_call.1} parent=5 // pred_region
        %s248 = ssub.s32 %s17, 1
        // Predicated region
        $region45: #{tpu_custom_call.1} parent=43 // pred_check
          %p249 = pneg %p38
        $region46: #{tpu_custom_call.1} parent=43 // pred_check_branch
          %251 = sbr.rel (%p249) target = $region48
        $region47: #{tpu_custom_call.1} parent=43 // pred_region
          %252 = dma.done [#allocation4], 128
        $region48: #{tpu_custom_call.1} parent=43 // pred_fallthru
          _
        %s253 = sand.u32 %s22, 1
        %s254 = scalar_lea.sflag [#allocation7], %s253
        %s255 = sand.u32 %s51, 1
        %s256 = smul.addr %s255, 512
        %s257 = scalar_lea.vmem [#allocation6], %s256
        // Predicated region
        $region49: #{tpu_custom_call.1} parent=43 // pred_check
          %p258 = pneg %p64
        $region50: #{tpu_custom_call.1} parent=43 // pred_check_branch
          %260 = sbr.rel (%p258) target = $region52
        $region51: #{tpu_custom_call.1} parent=43 // pred_region
          %261 = dma.done %s254, 8192
        $region52: #{tpu_custom_call.1} parent=43 // pred_fallthru
          _
        // Predicated region
        $region53: #{tpu_custom_call.1} parent=43 // pred_check
          %p262 = pneg %p106
        $region54: #{tpu_custom_call.1} parent=43 // pred_check_branch
          %264 = sbr.rel (%p262) target = $region56
        $region55: #{tpu_custom_call.1} parent=43 // pred_region
          %265 = dma.done [#allocation7], 1024
        $region56: #{tpu_custom_call.1} parent=43 // pred_fallthru
          _
        %p266 = pneg %p38
        %p267 = pneg %p35
        %s268 = sand.u32 %s22, 1
        %s269 = scalar_lea.sflag [#allocation7], %s268
        %s270 = sand.u32 %s51, 1
        %s271 = smul.addr %s270, 512
        %s272 = scalar_lea.vmem [#allocation6], %s271
        %p273 = pneg %p64
        %p274 = pneg %p61
        %p275 = pneg %p85
        %p276 = pneg %p82
        %p277 = pneg %p106
        %p278 = pneg %p103
        %p279 = pneg %p127
        %p280 = pneg %p124
        %p281 = pneg %p148
        %p282 = pneg %p145
        %p283 = pneg %p169
        %p284 = pneg %p166
        %s285 = smul.u32 4, %s22
        %v287 = vld [vmem:[#allocation3] sm:$0xff]
        %v288 = vld [vmem:[%s2] sm:$0xf]
        %v289 = vld [vmem:[%s2 + $0x4] sm:$0xf]
        %v290 = vld [vmem:[%s2 + $0x8] sm:$0xf]
        %v291 = vld [vmem:[%s2 + $0xc] sm:$0xf]
        %v292 = vld [vmem:[%s2 + $0x10] sm:$0xf]
        %v293 = vld [vmem:[%s2 + $0x14] sm:$0xf]
        %v294 = vld [vmem:[%s2 + $0x18] sm:$0xf]
        %v295 = vld [vmem:[%s2 + $0x1c] sm:$0xf]
        %v296 = vld [vmem:[%s2 + $0x20] sm:$0xf]
        %v297 = vld [vmem:[%s2 + $0x24] sm:$0xf]
        %v298 = vld [vmem:[%s2 + $0x28] sm:$0xf]
        %v299 = vld [vmem:[%s2 + $0x2c] sm:$0xf]
        %v300 = vld [vmem:[%s2 + $0x30] sm:$0xf]
        %v301 = vld [vmem:[%s2 + $0x34] sm:$0xf]
        %v302 = vld [vmem:[%s2 + $0x38] sm:$0xf]
        %v303 = vld [vmem:[%s2 + $0x3c] sm:$0xf]
        %v304 = vld [vmem:[%s2 + $0x40] sm:$0xf]
        %v305 = vld [vmem:[%s2 + $0x44] sm:$0xf]
        %v306 = vld [vmem:[%s2 + $0x48] sm:$0xf]
        %v307 = vld [vmem:[%s2 + $0x4c] sm:$0xf]
        %v308 = vld [vmem:[%s2 + $0x50] sm:$0xf]
        %v309 = vld [vmem:[%s2 + $0x54] sm:$0xf]
        %v310 = vld [vmem:[%s2 + $0x58] sm:$0xf]
        %v311 = vld [vmem:[%s2 + $0x5c] sm:$0xf]
        %v312 = vld [vmem:[%s2 + $0x60] sm:$0xf]
        %v313 = vld [vmem:[%s2 + $0x64] sm:$0xf]
        %v314 = vld [vmem:[%s2 + $0x68] sm:$0xf]
        %v315 = vld [vmem:[%s2 + $0x6c] sm:$0xf]
        %v316 = vld [vmem:[%s2 + $0x70] sm:$0xf]
        %v317 = vld [vmem:[%s2 + $0x74] sm:$0xf]
        %v318 = vld [vmem:[%s2 + $0x78] sm:$0xf]
        %v319 = vld [vmem:[%s2 + $0x7c] sm:$0xf]
        %p320 = scmp.eq.s32.totalorder %s22, 0
        // Predicated region
        $region57: #{tpu_custom_call.1} parent=43 // pred_check
          %p321 = pneg %p320
        $region58: #{tpu_custom_call.1} parent=43 // pred_check_branch
          %323 = sbr.rel (%p321) target = $region60
        $region59: #{tpu_custom_call.1} parent=43 // pred_region
          %v325 = vunpack.c.l.b16 %v287
          %v326 = vunpack.c.h.b16 %v287
          %v327 = vpack.c.b16 %v325, %v325
          %v328 = vpack.c.b16 %v326, %v326
          %v363 = vunpack.c.l.b16 %v288
          %v364 = vunpack.c.l.b16 %v289
          %v365 = vunpack.c.l.b16 %v290
          %v366 = vunpack.c.l.b16 %v291
          %v367 = vunpack.c.l.b16 %v292
          %v368 = vunpack.c.l.b16 %v293
          %v369 = vunpack.c.l.b16 %v294
          %v370 = vunpack.c.l.b16 %v295
          %v371 = vunpack.c.l.b16 %v296
          %v372 = vunpack.c.l.b16 %v297
          %v373 = vunpack.c.l.b16 %v298
          %v374 = vunpack.c.l.b16 %v299
          %v375 = vunpack.c.l.b16 %v300
          %v376 = vunpack.c.l.b16 %v301
          %v377 = vunpack.c.l.b16 %v302
          %v378 = vunpack.c.l.b16 %v303
          %v379 = vunpack.c.l.b16 %v304
          %v380 = vunpack.c.l.b16 %v305
          %v381 = vunpack.c.l.b16 %v306
          %v382 = vunpack.c.l.b16 %v307
          %v383 = vunpack.c.l.b16 %v308
          %v384 = vunpack.c.l.b16 %v309
          %v385 = vunpack.c.l.b16 %v310
          %v386 = vunpack.c.l.b16 %v311
          %v387 = vunpack.c.l.b16 %v312
          %v388 = vunpack.c.l.b16 %v313
          %v389 = vunpack.c.l.b16 %v314
          %v390 = vunpack.c.l.b16 %v315
          %v391 = vunpack.c.l.b16 %v316
          %v392 = vunpack.c.l.b16 %v317
          %v393 = vunpack.c.l.b16 %v318
          %v394 = vunpack.c.l.b16 %v319
          %v395 = vpack.c.b16 %v364, %v363
          %v396 = vpack.c.b16 %v366, %v365
          %v397 = vpack.c.b16 %v368, %v367
          %v398 = vpack.c.b16 %v370, %v369
          %v399 = vpack.c.b16 %v372, %v371
          %v400 = vpack.c.b16 %v374, %v373
          %v401 = vpack.c.b16 %v376, %v375
          %v402 = vpack.c.b16 %v378, %v377
          %v403 = vpack.c.b16 %v380, %v379
          %v404 = vpack.c.b16 %v382, %v381
          %v405 = vpack.c.b16 %v384, %v383
          %v406 = vpack.c.b16 %v386, %v385
          %v407 = vpack.c.b16 %v388, %v387
          %v408 = vpack.c.b16 %v390, %v389
          %v409 = vpack.c.b16 %v392, %v391
          %v410 = vpack.c.b16 %v394, %v393
          %427 = vmatprep.subr.bf16.mxu0 0
          %428 = vmatpush1.bf16.msra.mxu0 %v395
          %429 = vmatprep.subr.bf16.mxu0 0
          %430 = vmatpush1.bf16.msra.mxu0 %v396
          %431 = vmatprep.subr.bf16.mxu0 0
          %432 = vmatpush1.bf16.msra.mxu0 %v397
          %433 = vmatprep.subr.bf16.mxu0 0
          %434 = vmatpush1.bf16.msra.mxu0 %v398
          %435 = vmatprep.subr.bf16.mxu0 0
          %436 = vmatpush1.bf16.msra.mxu0 %v399
          %437 = vmatprep.subr.bf16.mxu0 0
          %438 = vmatpush1.bf16.msra.mxu0 %v400
          %439 = vmatprep.subr.bf16.mxu0 0
          %440 = vmatpush1.bf16.msra.mxu0 %v401
          %441 = vmatprep.subr.bf16.mxu0 0
          %442 = vmatpush1.bf16.msra.mxu0 %v402
          %443 = vmatprep.subr.bf16.mxu0 0
          %444 = vmatpush1.bf16.msra.mxu0 %v403
          %445 = vmatprep.subr.bf16.mxu0 0
          %446 = vmatpush1.bf16.msra.mxu0 %v404
          %447 = vmatprep.subr.bf16.mxu0 0
          %448 = vmatpush1.bf16.msra.mxu0 %v405
          %449 = vmatprep.subr.bf16.mxu0 0
          %450 = vmatpush1.bf16.msra.mxu0 %v406
          %451 = vmatprep.subr.bf16.mxu0 0
          %452 = vmatpush1.bf16.msra.mxu0 %v407
          %453 = vmatprep.subr.bf16.mxu0 0
          %454 = vmatpush1.bf16.msra.mxu0 %v408
          %455 = vmatprep.subr.bf16.mxu0 0
          %456 = vmatpush1.bf16.msra.mxu0 %v409
          %457 = vmatprep.subr.bf16.mxu0 0
          %458 = vmatpush1.bf16.msra.mxu0 %v410
          %459 = vmatprep.mubr.bf16.mxu0 %v328
          %460 = vmatmul.mubr.bf16.gmra.mrb[0].mxu0 %v327
          %v461 = vpop.f32.mrb[0].mxu0
          %v462 = vadd.f32 0.0, %v461
          %v463 = vpop.f32.mrb[0].mxu0
          %v464 = vpop.f32.mrb[0].mxu0
          %v465 = vpop.f32.mrb[0].mxu0
          %466 = vdwg.mxu0
          %v467 = vld [vmem:[%s4] sm:$0xf]
          %v468 = vld [vmem:[%s4 + $0x4] sm:$0xf]
          %v469 = vpack.c.bf16 %v462, %v462
          %v472 = vunpack.c.l.b16 %v467
          %v473 = vunpack.c.l.b16 %v468
          %v474 = vpack.c.b16 %v473, %v472
          %vm475 = vcmask 64512
          %v477 = vsel %vm475, %v474, 0
          %vm479 = vcmask 1043456
          %v481 = vsel %vm479, %v469, 0
          %483 = vmatprep.subr.bf16.mxu0 0
          %484 = vmatpush1.bf16.msra.mxu0 %v481
          %485 = vmatprep.subr.bf16.mxu0 0
          %486 = vmatpush1.bf16.msra.mxu0 0
          %487 = vmatprep.subr.bf16.mxu0 0
          %488 = vmatpush1.bf16.msra.mxu0 0
          %489 = vmatprep.subr.bf16.mxu0 0
          %490 = vmatpush1.bf16.msra.mxu0 0
          %491 = vmatprep.subr.bf16.mxu0 0
          %492 = vmatpush1.bf16.msra.mxu0 0
          %493 = vmatprep.subr.bf16.mxu0 0
          %494 = vmatpush1.bf16.msra.mxu0 0
          %495 = vmatprep.subr.bf16.mxu0 0
          %496 = vmatpush1.bf16.msra.mxu0 0
          %497 = vmatprep.subr.bf16.mxu0 0
          %498 = vmatpush1.bf16.msra.mxu0 0
          %499 = vmatprep.subr.bf16.mxu0 0
          %500 = vmatpush1.bf16.msra.mxu0 0
          %501 = vmatprep.subr.bf16.mxu0 0
          %502 = vmatpush1.bf16.msra.mxu0 0
          %503 = vmatprep.subr.bf16.mxu0 0
          %504 = vmatpush1.bf16.msra.mxu0 0
          %505 = vmatprep.subr.bf16.mxu0 0
          %506 = vmatpush1.bf16.msra.mxu0 0
          %507 = vmatprep.subr.bf16.mxu0 0
          %508 = vmatpush1.bf16.msra.mxu0 0
          %509 = vmatprep.subr.bf16.mxu0 0
          %510 = vmatpush1.bf16.msra.mxu0 0
          %511 = vmatprep.subr.bf16.mxu0 0
          %512 = vmatpush1.bf16.msra.mxu0 0
          %513 = vmatprep.subr.bf16.mxu0 0
          %514 = vmatpush1.bf16.msra.mxu0 0
          %515 = vmatprep.mubr.bf16.mxu0 0
          %516 = vmatmul.mubr.bf16.gmra.mrb[0].mxu0 %v477
          %v517 = vpop.f32.mrb[0].mxu0
          %v518 = vadd.f32 0.0, %v517
          %v519 = vpop.f32.mrb[0].mxu0
          %v520 = vpop.f32.mrb[0].mxu0
          %v521 = vadd.f32 0.0, %v520
          %v522 = vpop.f32.mrb[0].mxu0
          %523 = vdwg.mxu0
          %vm524 = vcmask 523264
          %525 = vst.msk [vmem:[#allocation2] sm:$0xff] %vm524, %v518
          %526 = vst.msk [vmem:[#allocation2 + $0x8] sm:$0xff] %vm524, %v521
        $region60: #{tpu_custom_call.1} parent=43 // pred_fallthru
          _
        %v527 = vld [vmem:[%s257] sm:$0xff]
        %v528 = vld [vmem:[%s257 + $0x8] sm:$0xff]
        %v529 = vld [vmem:[%s257 + $0x10] sm:$0xff]
        %v530 = vld [vmem:[%s257 + $0x18] sm:$0xff]
        %v531 = vld [vmem:[%s257 + $0x20] sm:$0xff]
        %v532 = vld [vmem:[%s257 + $0x28] sm:$0xff]
        %v533 = vld [vmem:[%s257 + $0x30] sm:$0xff]
        %v534 = vld [vmem:[%s257 + $0x38] sm:$0xff]
        %v535 = vld [vmem:[%s257 + $0x40] sm:$0xff]
        %v536 = vld [vmem:[%s257 + $0x48] sm:$0xff]
        %v537 = vld [vmem:[%s257 + $0x50] sm:$0xff]
        %v538 = vld [vmem:[%s257 + $0x58] sm:$0xff]
        %v539 = vld [vmem:[%s257 + $0x60] sm:$0xff]
        %v540 = vld [vmem:[%s257 + $0x68] sm:$0xff]
        %v541 = vld [vmem:[%s257 + $0x70] sm:$0xff]
        %v542 = vld [vmem:[%s257 + $0x78] sm:$0xff]
        %v543 = vld [vmem:[%s257 + $0x80] sm:$0xff]
        %v544 = vld [vmem:[%s257 + $0x88] sm:$0xff]
        %v545 = vld [vmem:[%s257 + $0x90] sm:$0xff]
        %v546 = vld [vmem:[%s257 + $0x98] sm:$0xff]
        %v547 = vld [vmem:[%s257 + $0xa0] sm:$0xff]
        %v548 = vld [vmem:[%s257 + $0xa8] sm:$0xff]
        %v549 = vld [vmem:[%s257 + $0xb0] sm:$0xff]
        %v550 = vld [vmem:[%s257 + $0xb8] sm:$0xff]
        %v551 = vld [vmem:[%s257 + $0xc0] sm:$0xff]
        %v552 = vld [vmem:[%s257 + $0xc8] sm:$0xff]
        %v553 = vld [vmem:[%s257 + $0xd0] sm:$0xff]
        %v554 = vld [vmem:[%s257 + $0xd8] sm:$0xff]
        %v555 = vld [vmem:[%s257 + $0xe0] sm:$0xff]
        %v556 = vld [vmem:[%s257 + $0xe8] sm:$0xff]
        %v557 = vld [vmem:[%s257 + $0xf0] sm:$0xff]
        %v558 = vld [vmem:[%s257 + $0xf8] sm:$0xff]
        %v559 = vld [vmem:[%s257 + $0x100] sm:$0xff]
        %v560 = vld [vmem:[%s257 + $0x108] sm:$0xff]
        %v561 = vld [vmem:[%s257 + $0x110] sm:$0xff]
        %v562 = vld [vmem:[%s257 + $0x118] sm:$0xff]
        %v563 = vld [vmem:[%s257 + $0x120] sm:$0xff]
        %v564 = vld [vmem:[%s257 + $0x128] sm:$0xff]
        %v565 = vld [vmem:[%s257 + $0x130] sm:$0xff]
        %v566 = vld [vmem:[%s257 + $0x138] sm:$0xff]
        %v567 = vld [vmem:[%s257 + $0x140] sm:$0xff]
        %v568 = vld [vmem:[%s257 + $0x148] sm:$0xff]
        %v569 = vld [vmem:[%s257 + $0x150] sm:$0xff]
        %v570 = vld [vmem:[%s257 + $0x158] sm:$0xff]
        %v571 = vld [vmem:[%s257 + $0x160] sm:$0xff]
        %v572 = vld [vmem:[%s257 + $0x168] sm:$0xff]
        %v573 = vld [vmem:[%s257 + $0x170] sm:$0xff]
        %v574 = vld [vmem:[%s257 + $0x178] sm:$0xff]
        %v575 = vld [vmem:[%s257 + $0x180] sm:$0xff]
        %v576 = vld [vmem:[%s257 + $0x188] sm:$0xff]
        %v577 = vld [vmem:[%s257 + $0x190] sm:$0xff]
        %v578 = vld [vmem:[%s257 + $0x198] sm:$0xff]
        %v579 = vld [vmem:[%s257 + $0x1a0] sm:$0xff]
        %v580 = vld [vmem:[%s257 + $0x1a8] sm:$0xff]
        %v581 = vld [vmem:[%s257 + $0x1b0] sm:$0xff]
        %v582 = vld [vmem:[%s257 + $0x1b8] sm:$0xff]
        %v583 = vld [vmem:[%s257 + $0x1c0] sm:$0xff]
        %v584 = vld [vmem:[%s257 + $0x1c8] sm:$0xff]
        %v585 = vld [vmem:[%s257 + $0x1d0] sm:$0xff]
        %v586 = vld [vmem:[%s257 + $0x1d8] sm:$0xff]
        %v587 = vld [vmem:[%s257 + $0x1e0] sm:$0xff]
        %v588 = vld [vmem:[%s257 + $0x1e8] sm:$0xff]
        %v589 = vld [vmem:[%s257 + $0x1f0] sm:$0xff]
        %v590 = vld [vmem:[%s257 + $0x1f8] sm:$0xff]
        %v592 = vunpack.c.l.b16 %v287
        %v593 = vunpack.c.h.b16 %v287
        %v594 = vpack.c.b16 %v592, %v592
        %v595 = vpack.c.b16 %v593, %v593
        %v662 = vunpack.c.l.b16 %v527
        %v663 = vunpack.c.h.b16 %v527
        %v664 = vunpack.c.l.b16 %v528
        %v665 = vunpack.c.h.b16 %v528
        %v666 = vunpack.c.l.b16 %v529
        %v667 = vunpack.c.h.b16 %v529
        %v668 = vunpack.c.l.b16 %v530
        %v669 = vunpack.c.h.b16 %v530
        %v670 = vunpack.c.l.b16 %v531
        %v671 = vunpack.c.h.b16 %v531
        %v672 = vunpack.c.l.b16 %v532
        %v673 = vunpack.c.h.b16 %v532
        %v674 = vunpack.c.l.b16 %v533
        %v675 = vunpack.c.h.b16 %v533
        %v676 = vunpack.c.l.b16 %v534
        %v677 = vunpack.c.h.b16 %v534
        %v678 = vunpack.c.l.b16 %v535
        %v679 = vunpack.c.h.b16 %v535
        %v680 = vunpack.c.l.b16 %v536
        %v681 = vunpack.c.h.b16 %v536
        %v682 = vunpack.c.l.b16 %v537
        %v683 = vunpack.c.h.b16 %v537
        %v684 = vunpack.c.l.b16 %v538
        %v685 = vunpack.c.h.b16 %v538
        %v686 = vunpack.c.l.b16 %v539
        %v687 = vunpack.c.h.b16 %v539
        %v688 = vunpack.c.l.b16 %v540
        %v689 = vunpack.c.h.b16 %v540
        %v690 = vunpack.c.l.b16 %v541
        %v691 = vunpack.c.h.b16 %v541
        %v692 = vunpack.c.l.b16 %v542
        %v693 = vunpack.c.h.b16 %v542
        %v694 = vunpack.c.l.b16 %v543
        %v695 = vunpack.c.h.b16 %v543
        %v696 = vunpack.c.l.b16 %v544
        %v697 = vunpack.c.h.b16 %v544
        %v698 = vunpack.c.l.b16 %v545
        %v699 = vunpack.c.h.b16 %v545
        %v700 = vunpack.c.l.b16 %v546
        %v701 = vunpack.c.h.b16 %v546
        %v702 = vunpack.c.l.b16 %v547
        %v703 = vunpack.c.h.b16 %v547
        %v704 = vunpack.c.l.b16 %v548
        %v705 = vunpack.c.h.b16 %v548
        %v706 = vunpack.c.l.b16 %v549
        %v707 = vunpack.c.h.b16 %v549
        %v708 = vunpack.c.l.b16 %v550
        %v709 = vunpack.c.h.b16 %v550
        %v710 = vunpack.c.l.b16 %v551
        %v711 = vunpack.c.h.b16 %v551
        %v712 = vunpack.c.l.b16 %v552
        %v713 = vunpack.c.h.b16 %v552
        %v714 = vunpack.c.l.b16 %v553
        %v715 = vunpack.c.h.b16 %v553
        %v716 = vunpack.c.l.b16 %v554
        %v717 = vunpack.c.h.b16 %v554
        %v718 = vunpack.c.l.b16 %v555
        %v719 = vunpack.c.h.b16 %v555
        %v720 = vunpack.c.l.b16 %v556
        %v721 = vunpack.c.h.b16 %v556
        %v722 = vunpack.c.l.b16 %v557
        %v723 = vunpack.c.h.b16 %v557
        %v724 = vunpack.c.l.b16 %v558
        %v725 = vunpack.c.h.b16 %v558
        %v726 = vunpack.c.l.b16 %v559
        %v727 = vunpack.c.h.b16 %v559
        %v728 = vunpack.c.l.b16 %v560
        %v729 = vunpack.c.h.b16 %v560
        %v730 = vunpack.c.l.b16 %v561
        %v731 = vunpack.c.h.b16 %v561
        %v732 = vunpack.c.l.b16 %v562
        %v733 = vunpack.c.h.b16 %v562
        %v734 = vunpack.c.l.b16 %v563
        %v735 = vunpack.c.h.b16 %v563
        %v736 = vunpack.c.l.b16 %v564
        %v737 = vunpack.c.h.b16 %v564
        %v738 = vunpack.c.l.b16 %v565
        %v739 = vunpack.c.h.b16 %v565
        %v740 = vunpack.c.l.b16 %v566
        %v741 = vunpack.c.h.b16 %v566
        %v742 = vunpack.c.l.b16 %v567
        %v743 = vunpack.c.h.b16 %v567
        %v744 = vunpack.c.l.b16 %v568
        %v745 = vunpack.c.h.b16 %v568
        %v746 = vunpack.c.l.b16 %v569
        %v747 = vunpack.c.h.b16 %v569
        %v748 = vunpack.c.l.b16 %v570
        %v749 = vunpack.c.h.b16 %v570
        %v750 = vunpack.c.l.b16 %v571
        %v751 = vunpack.c.h.b16 %v571
        %v752 = vunpack.c.l.b16 %v572
        %v753 = vunpack.c.h.b16 %v572
        %v754 = vunpack.c.l.b16 %v573
        %v755 = vunpack.c.h.b16 %v573
        %v756 = vunpack.c.l.b16 %v574
        %v757 = vunpack.c.h.b16 %v574
        %v758 = vunpack.c.l.b16 %v575
        %v759 = vunpack.c.h.b16 %v575
        %v760 = vunpack.c.l.b16 %v576
        %v761 = vunpack.c.h.b16 %v576
        %v762 = vunpack.c.l.b16 %v577
        %v763 = vunpack.c.h.b16 %v577
        %v764 = vunpack.c.l.b16 %v578
        %v765 = vunpack.c.h.b16 %v578
        %v766 = vunpack.c.l.b16 %v579
        %v767 = vunpack.c.h.b16 %v579
        %v768 = vunpack.c.l.b16 %v580
        %v769 = vunpack.c.h.b16 %v580
        %v770 = vunpack.c.l.b16 %v581
        %v771 = vunpack.c.h.b16 %v581
        %v772 = vunpack.c.l.b16 %v582
        %v773 = vunpack.c.h.b16 %v582
        %v774 = vunpack.c.l.b16 %v583
        %v775 = vunpack.c.h.b16 %v583
        %v776 = vunpack.c.l.b16 %v584
        %v777 = vunpack.c.h.b16 %v584
        %v778 = vunpack.c.l.b16 %v585
        %v779 = vunpack.c.h.b16 %v585
        %v780 = vunpack.c.l.b16 %v586
        %v781 = vunpack.c.h.b16 %v586
        %v782 = vunpack.c.l.b16 %v587
        %v783 = vunpack.c.h.b16 %v587
        %v784 = vunpack.c.l.b16 %v588
        %v785 = vunpack.c.h.b16 %v588
        %v786 = vunpack.c.l.b16 %v589
        %v787 = vunpack.c.h.b16 %v589
        %v788 = vunpack.c.l.b16 %v590
        %v789 = vunpack.c.h.b16 %v590
        %v790 = vpack.c.b16 %v666, %v662
        %v791 = vpack.c.b16 %v667, %v663
        %v792 = vpack.c.b16 %v668, %v664
        %v793 = vpack.c.b16 %v669, %v665
        %v794 = vpack.c.b16 %v674, %v670
        %v795 = vpack.c.b16 %v675, %v671
        %v796 = vpack.c.b16 %v676, %v672
        %v797 = vpack.c.b16 %v677, %v673
        %v798 = vpack.c.b16 %v682, %v678
        %v799 = vpack.c.b16 %v683, %v679
        %v800 = vpack.c.b16 %v684, %v680
        %v801 = vpack.c.b16 %v685, %v681
        %v802 = vpack.c.b16 %v690, %v686
        %v803 = vpack.c.b16 %v691, %v687
        %v804 = vpack.c.b16 %v692, %v688
        %v805 = vpack.c.b16 %v693, %v689
        %v806 = vpack.c.b16 %v698, %v694
        %v807 = vpack.c.b16 %v699, %v695
        %v808 = vpack.c.b16 %v700, %v696
        %v809 = vpack.c.b16 %v701, %v697
        %v810 = vpack.c.b16 %v706, %v702
        %v811 = vpack.c.b16 %v707, %v703
        %v812 = vpack.c.b16 %v708, %v704
        %v813 = vpack.c.b16 %v709, %v705
        %v814 = vpack.c.b16 %v714, %v710
        %v815 = vpack.c.b16 %v715, %v711
        %v816 = vpack.c.b16 %v716, %v712
        %v817 = vpack.c.b16 %v717, %v713
        %v818 = vpack.c.b16 %v722, %v718
        %v819 = vpack.c.b16 %v723, %v719
        %v820 = vpack.c.b16 %v724, %v720
        %v821 = vpack.c.b16 %v725, %v721
        %v822 = vpack.c.b16 %v730, %v726
        %v823 = vpack.c.b16 %v731, %v727
        %v824 = vpack.c.b16 %v732, %v728
        %v825 = vpack.c.b16 %v733, %v729
        %v826 = vpack.c.b16 %v738, %v734
        %v827 = vpack.c.b16 %v739, %v735
        %v828 = vpack.c.b16 %v740, %v736
        %v829 = vpack.c.b16 %v741, %v737
        %v830 = vpack.c.b16 %v746, %v742
        %v831 = vpack.c.b16 %v747, %v743
        %v832 = vpack.c.b16 %v748, %v744
        %v833 = vpack.c.b16 %v749, %v745
        %v834 = vpack.c.b16 %v754, %v750
        %v835 = vpack.c.b16 %v755, %v751
        %v836 = vpack.c.b16 %v756, %v752
        %v837 = vpack.c.b16 %v757, %v753
        %v838 = vpack.c.b16 %v762, %v758
        %v839 = vpack.c.b16 %v763, %v759
        %v840 = vpack.c.b16 %v764, %v760
        %v841 = vpack.c.b16 %v765, %v761
        %v842 = vpack.c.b16 %v770, %v766
        %v843 = vpack.c.b16 %v771, %v767
        %v844 = vpack.c.b16 %v772, %v768
        %v845 = vpack.c.b16 %v773, %v769
        %v846 = vpack.c.b16 %v778, %v774
        %v847 = vpack.c.b16 %v779, %v775
        %v848 = vpack.c.b16 %v780, %v776
        %v849 = vpack.c.b16 %v781, %v777
        %v850 = vpack.c.b16 %v786, %v782
        %v851 = vpack.c.b16 %v787, %v783
        %v852 = vpack.c.b16 %v788, %v784
        %v853 = vpack.c.b16 %v789, %v785
        %918 = vmatprep.subr.bf16.mxu0 %v791
        %919 = vmatpush1.bf16.msra.mxu0 %v790
        %920 = vmatprep.subr.bf16.mxu0 %v795
        %921 = vmatpush1.bf16.msra.mxu0 %v794
        %922 = vmatprep.subr.bf16.mxu0 %v799
        %923 = vmatpush1.bf16.msra.mxu0 %v798
        %924 = vmatprep.subr.bf16.mxu0 %v803
        %925 = vmatpush1.bf16.msra.mxu0 %v802
        %926 = vmatprep.subr.bf16.mxu0 %v807
        %927 = vmatpush1.bf16.msra.mxu0 %v806
        %928 = vmatprep.subr.bf16.mxu0 %v811
        %929 = vmatpush1.bf16.msra.mxu0 %v810
        %930 = vmatprep.subr.bf16.mxu0 %v815
        %931 = vmatpush1.bf16.msra.mxu0 %v814
        %932 = vmatprep.subr.bf16.mxu0 %v819
        %933 = vmatpush1.bf16.msra.mxu0 %v818
        %934 = vmatprep.subr.bf16.mxu0 %v823
        %935 = vmatpush1.bf16.msra.mxu0 %v822
        %936 = vmatprep.subr.bf16.mxu0 %v827
        %937 = vmatpush1.bf16.msra.mxu0 %v826
        %938 = vmatprep.subr.bf16.mxu0 %v831
        %939 = vmatpush1.bf16.msra.mxu0 %v830
        %940 = vmatprep.subr.bf16.mxu0 %v835
        %941 = vmatpush1.bf16.msra.mxu0 %v834
        %942 = vmatprep.subr.bf16.mxu0 %v839
        %943 = vmatpush1.bf16.msra.mxu0 %v838
        %944 = vmatprep.subr.bf16.mxu0 %v843
        %945 = vmatpush1.bf16.msra.mxu0 %v842
        %946 = vmatprep.subr.bf16.mxu0 %v847
        %947 = vmatpush1.bf16.msra.mxu0 %v846
        %948 = vmatprep.subr.bf16.mxu0 %v851
        %949 = vmatpush1.bf16.msra.mxu0 %v850
        %950 = vmatprep.mubr.bf16.mxu0 %v595
        %951 = vmatmul.mubr.bf16.gmra.mrb[0].mxu0 %v594
        %v952 = vpop.f32.mrb[0].mxu0
        %v953 = vadd.f32 0.0, %v952
        %v954 = vpop.f32.mrb[0].mxu0
        %v955 = vadd.f32 0.0, %v954
        %v956 = vpop.f32.mrb[0].mxu0
        %v957 = vpop.f32.mrb[0].mxu0
        %958 = vdwg.mxu0
        %959 = vmatprep.subr.bf16.mxu0 %v793
        %960 = vmatpush1.bf16.msra.mxu0 %v792
        %961 = vmatprep.subr.bf16.mxu0 %v797
        %962 = vmatpush1.bf16.msra.mxu0 %v796
        %963 = vmatprep.subr.bf16.mxu0 %v801
        %964 = vmatpush1.bf16.msra.mxu0 %v800
        %965 = vmatprep.subr.bf16.mxu0 %v805
        %966 = vmatpush1.bf16.msra.mxu0 %v804
        %967 = vmatprep.subr.bf16.mxu0 %v809
        %968 = vmatpush1.bf16.msra.mxu0 %v808
        %969 = vmatprep.subr.bf16.mxu0 %v813
        %970 = vmatpush1.bf16.msra.mxu0 %v812
        %971 = vmatprep.subr.bf16.mxu0 %v817
        %972 = vmatpush1.bf16.msra.mxu0 %v816
        %973 = vmatprep.subr.bf16.mxu0 %v821
        %974 = vmatpush1.bf16.msra.mxu0 %v820
        %975 = vmatprep.subr.bf16.mxu0 %v825
        %976 = vmatpush1.bf16.msra.mxu0 %v824
        %977 = vmatprep.subr.bf16.mxu0 %v829
        %978 = vmatpush1.bf16.msra.mxu0 %v828
        %979 = vmatprep.subr.bf16.mxu0 %v833
        %980 = vmatpush1.bf16.msra.mxu0 %v832
        %981 = vmatprep.subr.bf16.mxu0 %v837
        %982 = vmatpush1.bf16.msra.mxu0 %v836
        %983 = vmatprep.subr.bf16.mxu0 %v841
        %984 = vmatpush1.bf16.msra.mxu0 %v840
        %985 = vmatprep.subr.bf16.mxu0 %v845
        %986 = vmatpush1.bf16.msra.mxu0 %v844
        %987 = vmatprep.subr.bf16.mxu0 %v849
        %988 = vmatpush1.bf16.msra.mxu0 %v848
        %989 = vmatprep.subr.bf16.mxu0 %v853
        %990 = vmatpush1.bf16.msra.mxu0 %v852
        %991 = vmatprep.mubr.bf16.mxu0 %v595
        %992 = vmatmul.mubr.bf16.gmra.mrb[0].mxu0 %v594
        %v993 = vpop.f32.mrb[0].mxu0
        %v994 = vadd.f32 0.0, %v993
        %v995 = vpop.f32.mrb[0].mxu0
        %v996 = vadd.f32 0.0, %v995
        %v997 = vpop.f32.mrb[0].mxu0
        %v998 = vpop.f32.mrb[0].mxu0
        %999 = vdwg.mxu0
        %v1000 = vmul.f32 %v953, %v953
        %v1001 = vmul.f32 %v955, %v955
        %v1002 = vmul.f32 %v994, %v994
        %v1003 = vmul.f32 %v996, %v996
        %v1004 = vadd.f32 %v1000, %v1002
        %v1005 = vadd.f32 %v1001, %v1003
        %v1006 = vrsqrt.pop %v1004
        %v1007 = vmul.f32 %v1004, %v1006
        %vm1008 = vcmp.eq.f32.partialorder %v1004, inf
        %v1009 = vsel %vm1008, %v1004, %v1007
        %vm1010 = vcmp.eq.f32.partialorder %v1004, 0.0
        %v1011 = vand.u32 %v1004, 2147483648
        %v1012 = vsel %vm1010, %v1011, %v1009
        %v1013 = vrsqrt.pop %v1005
        %v1014 = vmul.f32 %v1005, %v1013
        %vm1015 = vcmp.eq.f32.partialorder %v1005, inf
        %v1016 = vsel %vm1015, %v1005, %v1014
        %vm1017 = vcmp.eq.f32.partialorder %v1005, 0.0
        %v1018 = vand.u32 %v1005, 2147483648
        %v1019 = vsel %vm1017, %v1018, %v1016
        %v1020 = vpack.c.bf16 %v1012, %v1012
        %v1021 = vpack.c.bf16 %v1019, %v1019
        %v1054 = vunpack.c.l.b16 %v288
        %v1055 = vunpack.c.l.b16 %v289
        %v1056 = vunpack.c.l.b16 %v290
        %v1057 = vunpack.c.l.b16 %v291
        %v1058 = vunpack.c.l.b16 %v292
        %v1059 = vunpack.c.l.b16 %v293
        %v1060 = vunpack.c.l.b16 %v294
        %v1061 = vunpack.c.l.b16 %v295
        %v1062 = vunpack.c.l.b16 %v296
        %v1063 = vunpack.c.l.b16 %v297
        %v1064 = vunpack.c.l.b16 %v298
        %v1065 = vunpack.c.l.b16 %v299
        %v1066 = vunpack.c.l.b16 %v300
        %v1067 = vunpack.c.l.b16 %v301
        %v1068 = vunpack.c.l.b16 %v302
        %v1069 = vunpack.c.l.b16 %v303
        %v1070 = vunpack.c.l.b16 %v304
        %v1071 = vunpack.c.l.b16 %v305
        %v1072 = vunpack.c.l.b16 %v306
        %v1073 = vunpack.c.l.b16 %v307
        %v1074 = vunpack.c.l.b16 %v308
        %v1075 = vunpack.c.l.b16 %v309
        %v1076 = vunpack.c.l.b16 %v310
        %v1077 = vunpack.c.l.b16 %v311
        %v1078 = vunpack.c.l.b16 %v312
        %v1079 = vunpack.c.l.b16 %v313
        %v1080 = vunpack.c.l.b16 %v314
        %v1081 = vunpack.c.l.b16 %v315
        %v1082 = vunpack.c.l.b16 %v316
        %v1083 = vunpack.c.l.b16 %v317
        %v1084 = vunpack.c.l.b16 %v318
        %v1085 = vunpack.c.l.b16 %v319
        %v1086 = vpack.c.b16 %v1055, %v1054
        %v1087 = vpack.c.b16 %v1057, %v1056
        %v1088 = vpack.c.b16 %v1059, %v1058
        %v1089 = vpack.c.b16 %v1061, %v1060
        %v1090 = vpack.c.b16 %v1063, %v1062
        %v1091 = vpack.c.b16 %v1065, %v1064
        %v1092 = vpack.c.b16 %v1067, %v1066
        %v1093 = vpack.c.b16 %v1069, %v1068
        %v1094 = vpack.c.b16 %v1071, %v1070
        %v1095 = vpack.c.b16 %v1073, %v1072
        %v1096 = vpack.c.b16 %v1075, %v1074
        %v1097 = vpack.c.b16 %v1077, %v1076
        %v1098 = vpack.c.b16 %v1079, %v1078
        %v1099 = vpack.c.b16 %v1081, %v1080
        %v1100 = vpack.c.b16 %v1083, %v1082
        %v1101 = vpack.c.b16 %v1085, %v1084
        %1118 = vmatprep.subr.bf16.mxu0 0
        %1119 = vmatpush1.bf16.msra.mxu0 %v1086
        %1120 = vmatprep.subr.bf16.mxu0 0
        %1121 = vmatpush1.bf16.msra.mxu0 %v1087
        %1122 = vmatprep.subr.bf16.mxu0 0
        %1123 = vmatpush1.bf16.msra.mxu0 %v1088
        %1124 = vmatprep.subr.bf16.mxu0 0
        %1125 = vmatpush1.bf16.msra.mxu0 %v1089
        %1126 = vmatprep.subr.bf16.mxu0 0
        %1127 = vmatpush1.bf16.msra.mxu0 %v1090
        %1128 = vmatprep.subr.bf16.mxu0 0
        %1129 = vmatpush1.bf16.msra.mxu0 %v1091
        %1130 = vmatprep.subr.bf16.mxu0 0
        %1131 = vmatpush1.bf16.msra.mxu0 %v1092
        %1132 = vmatprep.subr.bf16.mxu0 0
        %1133 = vmatpush1.bf16.msra.mxu0 %v1093
        %1134 = vmatprep.subr.bf16.mxu0 0
        %1135 = vmatpush1.bf16.msra.mxu0 %v1094
        %1136 = vmatprep.subr.bf16.mxu0 0
        %1137 = vmatpush1.bf16.msra.mxu0 %v1095
        %1138 = vmatprep.subr.bf16.mxu0 0
        %1139 = vmatpush1.bf16.msra.mxu0 %v1096
        %1140 = vmatprep.subr.bf16.mxu0 0
        %1141 = vmatpush1.bf16.msra.mxu0 %v1097
        %1142 = vmatprep.subr.bf16.mxu0 0
        %1143 = vmatpush1.bf16.msra.mxu0 %v1098
        %1144 = vmatprep.subr.bf16.mxu0 0
        %1145 = vmatpush1.bf16.msra.mxu0 %v1099
        %1146 = vmatprep.subr.bf16.mxu0 0
        %1147 = vmatpush1.bf16.msra.mxu0 %v1100
        %1148 = vmatprep.subr.bf16.mxu0 0
        %1149 = vmatpush1.bf16.msra.mxu0 %v1101
        %1150 = vmatprep.mubr.bf16.mxu0 %v1021
        %1151 = vmatmul.mubr.bf16.gmra.mrb[0].mxu0 %v1020
        %v1152 = vpop.f32.mrb[0].mxu0
        %v1153 = vadd.f32 0.0, %v1152
        %v1154 = vpop.f32.mrb[0].mxu0
        %v1155 = vpop.f32.mrb[0].mxu0
        %v1156 = vpop.f32.mrb[0].mxu0
        %1157 = vdwg.mxu0
        %v1158 = vld [vmem:[#allocation2] sm:$0xff]
        %v1159 = vld [vmem:[#allocation2 + $0x8] sm:$0xff]
        %s1160 = sadd.s32 %s22, 1
        %s1161 = smul.u32 %s1160, 2
        %s1162 = smul.addr %s1161, 4
        %s1163 = scalar_lea.vmem %s4, %s1162
        %v1164 = vld [vmem:[%s1163] sm:$0xf]
        %v1165 = vld [vmem:[%s1163 + $0x4] sm:$0xf]
        %v1166 = vpack.c.bf16 %v1153, %v1153
        %v1169 = vunpack.c.l.b16 %v1164
        %v1170 = vunpack.c.l.b16 %v1165
        %v1171 = vpack.c.b16 %v1170, %v1169
        %vm1172 = vcmask 64512
        %v1174 = vsel %vm1172, %v1171, 0
        %vm1176 = vcmask 1043456
        %v1178 = vsel %vm1176, %v1166, 0
        %1180 = vmatprep.subr.bf16.mxu0 0
        %1181 = vmatpush1.bf16.msra.mxu0 %v1178
        %1182 = vmatprep.subr.bf16.mxu0 0
        %1183 = vmatpush1.bf16.msra.mxu0 0
        %1184 = vmatprep.subr.bf16.mxu0 0
        %1185 = vmatpush1.bf16.msra.mxu0 0
        %1186 = vmatprep.subr.bf16.mxu0 0
        %1187 = vmatpush1.bf16.msra.mxu0 0
        %1188 = vmatprep.subr.bf16.mxu0 0
        %1189 = vmatpush1.bf16.msra.mxu0 0
        %1190 = vmatprep.subr.bf16.mxu0 0
        %1191 = vmatpush1.bf16.msra.mxu0 0
        %1192 = vmatprep.subr.bf16.mxu0 0
        %1193 = vmatpush1.bf16.msra.mxu0 0
        %1194 = vmatprep.subr.bf16.mxu0 0
        %1195 = vmatpush1.bf16.msra.mxu0 0
        %1196 = vmatprep.subr.bf16.mxu0 0
        %1197 = vmatpush1.bf16.msra.mxu0 0
        %1198 = vmatprep.subr.bf16.mxu0 0
        %1199 = vmatpush1.bf16.msra.mxu0 0
        %1200 = vmatprep.subr.bf16.mxu0 0
        %1201 = vmatpush1.bf16.msra.mxu0 0
        %1202 = vmatprep.subr.bf16.mxu0 0
        %1203 = vmatpush1.bf16.msra.mxu0 0
        %1204 = vmatprep.subr.bf16.mxu0 0
        %1205 = vmatpush1.bf16.msra.mxu0 0
        %1206 = vmatprep.subr.bf16.mxu0 0
        %1207 = vmatpush1.bf16.msra.mxu0 0
        %1208 = vmatprep.subr.bf16.mxu0 0
        %1209 = vmatpush1.bf16.msra.mxu0 0
        %1210 = vmatprep.subr.bf16.mxu0 0
        %1211 = vmatpush1.bf16.msra.mxu0 0
        %1212 = vmatprep.mubr.bf16.mxu0 0
        %1213 = vmatmul.mubr.bf16.gmra.mrb[0].mxu0 %v1174
        %v1214 = vpop.f32.mrb[0].mxu0
        %v1215 = vadd.f32 0.0, %v1214
        %v1216 = vpop.f32.mrb[0].mxu0
        %v1217 = vpop.f32.mrb[0].mxu0
        %v1218 = vadd.f32 0.0, %v1217
        %v1219 = vpop.f32.mrb[0].mxu0
        %1220 = vdwg.mxu0
        %v1221 = vadd.f32 %v1158, %v1215
        %v1222 = vadd.f32 %v1159, %v1218
        %vm1223 = vcmask 523264
        %1224 = vst.msk [vmem:[#allocation2] sm:$0xff] %vm1223, %v1221
        %1225 = vst.msk [vmem:[#allocation2 + $0x8] sm:$0xff] %vm1223, %v1222
        %p1226 = scmp.eq.s32.totalorder %s22, 7
        // Predicated region
        $region61: #{tpu_custom_call.1} parent=43 // pred_check
          %p1227 = pneg %p1226
        $region62: #{tpu_custom_call.1} parent=43 // pred_check_branch
          %1229 = sbr.rel (%p1227) target = $region64
        $region63: #{tpu_custom_call.1} parent=43 // pred_region
          %v1230 = vld [vmem:[#allocation2] sm:$0xff]
          %v1231 = vld [vmem:[#allocation2 + $0x8] sm:$0xff]
          %v1232 = vpack.c.bf16 %v1231, %v1230
          %v1233 = vld [vmem:[#allocation8] sm:$0xff]
          %v1234 = vld [vmem:[#allocation8 + $0x8] sm:$0xff]
          %v1235 = vld [vmem:[#allocation8 + $0x10] sm:$0xff]
          %v1236 = vld [vmem:[#allocation8 + $0x18] sm:$0xff]
          %v1237 = vld [vmem:[#allocation8 + $0x20] sm:$0xff]
          %v1238 = vld [vmem:[#allocation8 + $0x28] sm:$0xff]
          %v1239 = vld [vmem:[#allocation8 + $0x30] sm:$0xff]
          %v1240 = vld [vmem:[#allocation8 + $0x38] sm:$0xff]
          %v1241 = vld [vmem:[%s5] sm:$0xff]
          %v1242 = vld [vmem:[%s5 + $0x8] sm:$0xff]
          %1244 = vset.pattern.permute.xlu0 0
          %1245 = vperm.xlu0 %1244, %v1241
          %v1246 = vpop.permute.xlu0 %1245
          %1249 = vset.pattern.permute.xlu0 0
          %1250 = vperm.xlu0 %1249, %v1242
          %v1251 = vpop.permute.xlu0 %1250
          %v1261 = vunpack.c.l.b16 %v1233
          %v1262 = vunpack.c.h.b16 %v1233
          %v1263 = vunpack.c.l.b16 %v1234
          %v1264 = vunpack.c.h.b16 %v1234
          %v1265 = vunpack.c.l.b16 %v1235
          %v1266 = vunpack.c.h.b16 %v1235
          %v1267 = vunpack.c.l.b16 %v1236
          %v1268 = vunpack.c.h.b16 %v1236
          %v1269 = vunpack.c.l.b16 %v1237
          %v1270 = vunpack.c.h.b16 %v1237
          %v1271 = vunpack.c.l.b16 %v1238
          %v1272 = vunpack.c.h.b16 %v1238
          %v1273 = vunpack.c.l.b16 %v1239
          %v1274 = vunpack.c.h.b16 %v1239
          %v1275 = vunpack.c.l.b16 %v1240
          %v1276 = vunpack.c.h.b16 %v1240
          %v1277 = vpack.c.b16 %v1263, %v1261
          %v1278 = vpack.c.b16 %v1264, %v1262
          %v1279 = vpack.c.b16 %v1267, %v1265
          %v1280 = vpack.c.b16 %v1268, %v1266
          %v1281 = vpack.c.b16 %v1271, %v1269
          %v1282 = vpack.c.b16 %v1272, %v1270
          %v1283 = vpack.c.b16 %v1275, %v1273
          %v1284 = vpack.c.b16 %v1276, %v1274
          %v1294 = vsel %vm1223, %v1232, 0
          %1296 = vmatprep.subr.bf16.mxu0 %v1278
          %1297 = vmatpush1.bf16.msra.mxu0 %v1277
          %1298 = vmatprep.subr.bf16.mxu0 %v1280
          %1299 = vmatpush1.bf16.msra.mxu0 %v1279
          %1300 = vmatprep.subr.bf16.mxu0 %v1282
          %1301 = vmatpush1.bf16.msra.mxu0 %v1281
          %1302 = vmatprep.subr.bf16.mxu0 %v1284
          %1303 = vmatpush1.bf16.msra.mxu0 %v1283
          %1304 = vmatprep.subr.bf16.mxu0 0
          %1305 = vmatpush1.bf16.msra.mxu0 0
          %1306 = vmatprep.subr.bf16.mxu0 0
          %1307 = vmatpush1.bf16.msra.mxu0 0
          %1308 = vmatprep.subr.bf16.mxu0 0
          %1309 = vmatpush1.bf16.msra.mxu0 0
          %1310 = vmatprep.subr.bf16.mxu0 0
          %1311 = vmatpush1.bf16.msra.mxu0 0
          %1312 = vmatprep.subr.bf16.mxu0 0
          %1313 = vmatpush1.bf16.msra.mxu0 0
          %1314 = vmatprep.subr.bf16.mxu0 0
          %1315 = vmatpush1.bf16.msra.mxu0 0
          %1316 = vmatprep.subr.bf16.mxu0 0
          %1317 = vmatpush1.bf16.msra.mxu0 0
          %1318 = vmatprep.subr.bf16.mxu0 0
          %1319 = vmatpush1.bf16.msra.mxu0 0
          %1320 = vmatprep.subr.bf16.mxu0 0
          %1321 = vmatpush1.bf16.msra.mxu0 0
          %1322 = vmatprep.subr.bf16.mxu0 0
          %1323 = vmatpush1.bf16.msra.mxu0 0
          %1324 = vmatprep.subr.bf16.mxu0 0
          %1325 = vmatpush1.bf16.msra.mxu0 0
          %1326 = vmatprep.subr.bf16.mxu0 0
          %1327 = vmatpush1.bf16.msra.mxu0 0
          %1328 = vmatprep.mubr.bf16.mxu0 0
          %1329 = vmatmul.mubr.bf16.gmra.mrb[0].mxu0 %v1294
          %v1330 = vpop.f32.mrb[0].mxu0
          %v1331 = vadd.f32 %v1246, %v1330
          %v1332 = vpop.f32.mrb[0].mxu0
          %v1333 = vadd.f32 %v1246, %v1332
          %v1334 = vpop.f32.mrb[0].mxu0
          %v1335 = vadd.f32 %v1251, %v1334
          %v1336 = vpop.f32.mrb[0].mxu0
          %v1337 = vadd.f32 %v1251, %v1336
          %1338 = vdwg.mxu0
          %1339 = vst [vmem:[#allocation9] sm:$0xff] %v1331
          %1340 = vst [vmem:[#allocation9 + $0x8] sm:$0xff] %v1333
          %1341 = vst [vmem:[#allocation9 + $0x10] sm:$0xff] %v1335
          %1342 = vst [vmem:[#allocation9 + $0x18] sm:$0xff] %v1337
        $region64: #{tpu_custom_call.1} parent=43 // pred_fallthru
          _
        // Predicated region
        $region65: #{tpu_custom_call.1} parent=43 // pred_check
          %p1343 = pneg %p166
        $region66: #{tpu_custom_call.1} parent=43 // pred_check_branch
          %1345 = sbr.rel (%p1343) target = $region68
        $region67: #{tpu_custom_call.1} parent=43 // pred_region
          %s1347 = ssub.s32 512, 512
          %1348 = vsyncadd [#allocation5], %s1347
          %s1349 = sshll.u32 [#allocation9], 4
          %s1350 = int_to_ptr.vmem [resolvable:$true] %s1349
          %1355 = dma.vmem_to_hbm [thread:$0]  %s1350, 512, %s6, [#allocation5], 256, 256, 16
        $region68: #{tpu_custom_call.1} parent=43 // pred_fallthru
          _
        // Predicated region
        $region69: #{tpu_custom_call.1} parent=43 // pred_check
          %p1356 = pneg %p166
        $region70: #{tpu_custom_call.1} parent=43 // pred_check_branch
          %1358 = sbr.rel (%p1356) target = $region72
        $region71: #{tpu_custom_call.1} parent=43 // pred_region
          %1359 = dma.done [#allocation5], 512
        $region72: #{tpu_custom_call.1} parent=43 // pred_fallthru
          _
      $region44: #{tpu_custom_call.1} parent=5 // pred_fallthru
        _
      %p1360 = scmp.le.s32.totalorder 2, %s17
      // Predicated region
      $region73: #{tpu_custom_call.1} parent=5 // pred_check
        %p1361 = pneg %p1360
      $region74: #{tpu_custom_call.1} parent=5 // pred_check_branch
        %1363 = sbr.rel (%p1361) target = $region76
      $region75: #{tpu_custom_call.1} parent=5 // pred_region
        %s1364 = ssub.s32 %s17, 2
      $region76: #{tpu_custom_call.1} parent=5 // pred_fallthru
        _
    $region6: #{tpu_custom_call.1} parent=1 // loop_footer
      %s21 = sadd.s32 1, %s17
    $region7: #{tpu_custom_call.1} parent=1 // loop_footer_branch
      %16 = sbr.rel target = $region3
    $region8: #{tpu_custom_call.1} parent=1 // loop_exit
      _
    %1365 = vsyncpa [#allocation4], 1
    %s1366 = scalar_lea.sflag [#allocation4], 1
    %1367 = vsyncpa %s1366, 1
    %1368 = vsyncpa [#allocation7], 1
    %s1369 = scalar_lea.sflag [#allocation7], 1
    %1370 = vsyncpa %s1369, 1
    %1371 = vsyncpa [#allocation5], 1
    %s1372 = scalar_lea.sflag [#allocation5], 1
    %1373 = vsyncpa %s1372, 1

</llo_original>
